<compile_context>
chip_gen: v6e
topology: v6e:2x2x1
jax: 0.10.0
libtpu: 0.0.40
codegen_flags: <defaults>
</compile_context>

<pallas_src>
import math

import jax
import jax.numpy as jnp
from jax.experimental import pallas as pl
from jax.experimental.pallas import tpu as pltpu


def _round_up(x, m):
    return ((x + m - 1) // m) * m


def _cdiv(a, b):
    return (a + b - 1) // b


def _pick_tm(M, cap=512):
    """Output-tile rows: 256-aligned (MXU) for big M, sublane-aligned otherwise."""
    if M < 8:
        return M                       # full dim — exempt from the (8,128) rule
    if M >= cap:
        return cap
    if M >= 256:
        return 256
    return (M // 8) * 8


def _pick_tn(N, cap=512):
    """Output-tile cols: lane-dense 128-multiples, 256-aligned for v6e/v7x MXU."""
    if N < 128:
        return N                       # full dim — exempt from the (8,128) rule
    if N >= cap:
        return cap
    if N >= 256:
        return 256
    return 128


def _pick_tk(K, cap=1024):
    """Reduction tile: single K step when possible, else the 128-multiple in
    [512, cap] that minimizes K-tail zero padding (ties -> larger tile)."""
    Kr = _round_up(K, 128)
    if Kr <= cap:
        return Kr
    best, best_pad = cap, _round_up(K, cap) - K
    for cand in range(cap, 511, -128):
        pad = _round_up(K, cand) - K
        if pad < best_pad:
            best, best_pad = cand, pad
    return best


def _vmem_limit_bytes(tm, tn, tk, in_itemsize, out_itemsize):
    working_set = (
        2 * tm * tk * in_itemsize      # x tile, double-buffered
        + 2 * tk * tn * in_itemsize    # W tile, double-buffered
        + 2 * 1 * tn * 4               # bias row, double-buffered
        + 2 * tm * tn * out_itemsize   # output tile, double-buffered
        + tm * tn * 4                  # f32 accumulator scratch
    )
    try:
        info = pltpu.get_tpu_info()
        vmem_cap = int(getattr(info, "vmem_capacity_bytes", 64 << 20))
    except Exception:
        vmem_cap = 64 << 20            # assume the tightest case (v7x per-TC)
    # Honest budget: working set + compiler headroom, capped below capacity.
    return int(min(max(working_set + (4 << 20), 16 << 20), int(vmem_cap * 0.9)))


def _scale_linear_kernel(x_ref, w_ref, b_ref, scale_ref, o_ref, acc_ref):
    """One (tm, tn) tile of (x @ W + b) * scale.

    Grid = (M tiles, N tiles, K tiles); K is the trailing "arbitrary" reduction
    axis, accumulated in an f32 VMEM scratch tile.
    """
    k = pl.program_id(2)
    nk = pl.num_programs(2)

    # MXU matmul, f32 accumulation.
    part = jnp.dot(x_ref[...], w_ref[...], preferred_element_type=jnp.float32)

    @pl.when(k == 0)
    def _():
        acc_ref[...] = part            # overwrite: no zero-fill, no extra read

    @pl.when(k > 0)
    def _():
        acc_ref[...] += part

    @pl.when(k == nk - 1)
    def _():
        # Fused epilogue on the VPU: bias add + scale, all in f32.
        y = (acc_ref[...] + b_ref[...].astype(jnp.float32)) * scale_ref[0, 0]
        o_ref[...] = y.astype(o_ref.dtype)


def scale_linear(x, weight_t, bias, scale, *, compute_dtype=jnp.bfloat16,
                 out_dtype=None):
    """Computes (x @ weight_t + bias) * scale with a fused Pallas TPU matmul.

    x:        (..., K)
    weight_t: (K, N)  Linear weight, already transposed (torch weight is (N, K))
    bias:     (N,) or (1, N)
    scale:    python float or scalar array (fed through SMEM — no recompiles)
    returns   (..., N) in `out_dtype` (defaults to x.dtype)
    """
    *lead, K = x.shape
    N = weight_t.shape[1]
    M = int(math.prod(lead)) if lead else 1
    out_dtype = x.dtype if out_dtype is None else out_dtype

    tm = _pick_tm(M)
    tn = _pick_tn(N)
    tk = _pick_tk(K)

    grid_m = _cdiv(M, tm)
    grid_n = _cdiv(N, tn)
    # v7x megacore: keep >=2 "parallel" grid steps on large single-tile problems
    # so both TensorCores get work (no-op for small shapes).
    if grid_m * grid_n == 1:
        if M >= 512:
            tm = 256
            grid_m = _cdiv(M, tm)
        elif N >= 512:
            tn = 256
            grid_n = _cdiv(N, tn)

    K_pad = _round_up(K, tk)
    grid = (grid_m, grid_n, K_pad // tk)

    x2d = x.reshape(M, K).astype(compute_dtype)
    w = weight_t if weight_t.dtype == compute_dtype else weight_t.astype(compute_dtype)
    b = jnp.asarray(bias, dtype=jnp.float32).reshape(1, N)
    scale_arr = jnp.asarray(scale, dtype=jnp.float32).reshape(1, 1)

    # Only the reduction axis needs zero padding (for a correct sum); M/N edge
    # tiles are partial blocks handled by Pallas — garbage there only lands in
    # output rows/cols >= M/N, which are never stored.
    if K_pad != K:
        x2d = jnp.pad(x2d, ((0, 0), (0, K_pad - K)))
        if w.shape[0] != K_pad:
            w = jnp.pad(w, ((0, K_pad - K), (0, 0)))

    vmem_limit = _vmem_limit_bytes(
        tm, tn, tk, jnp.dtype(compute_dtype).itemsize, jnp.dtype(out_dtype).itemsize
    )

    out2d = pl.pallas_call(
        _scale_linear_kernel,
        out_shape=jax.ShapeDtypeStruct((M, N), out_dtype),
        grid_spec=pltpu.PrefetchScalarGridSpec(
            num_scalar_prefetch=0,
            grid=grid,
            in_specs=[
                pl.BlockSpec((tm, tk), lambda i, j, k: (i, k)),        # x tile
                pl.BlockSpec((tk, tn), lambda i, j, k: (k, j)),        # W tile
                pl.BlockSpec((1, tn), lambda i, j, k: (0, j)),         # bias row
                pl.BlockSpec(memory_space=pltpu.MemorySpace.SMEM),     # scale
            ],
            out_specs=pl.BlockSpec((tm, tn), lambda i, j, k: (i, j)),
            scratch_shapes=[pltpu.VMEM((tm, tn), jnp.float32)],
        ),
        compiler_params=pltpu.CompilerParams(
            dimension_semantics=("parallel", "parallel", "arbitrary"),
            vmem_limit_bytes=vmem_limit,
        ),
    )(x2d, w, b, scale_arr)

    return out2d.reshape(*lead, N)


class ScaleLinear:
    """Pallas equivalent of Scale(scale, nn.Linear(in_features, out_features)).

    The weight cast (f32 -> compute_dtype) is hoisted here so repeated forward
    calls don't pay an extra HBM read+write pass per call.
    """

    def __init__(self, weight, bias, scale, *, compute_dtype=jnp.bfloat16,
                 out_dtype=None):
        weight = jnp.asarray(weight)                           # torch layout (out, in)
        self.weight_t = weight.T.astype(compute_dtype)         # (K, N), cast once
        self.bias = jnp.asarray(bias, dtype=jnp.float32).reshape(1, -1)
        self.scale = jnp.asarray(scale, dtype=jnp.float32)
        self.compute_dtype = compute_dtype
        self.out_dtype = out_dtype

    def __call__(self, x):
        return scale_linear(
            x, self.weight_t, self.bias, self.scale,
            compute_dtype=self.compute_dtype, out_dtype=self.out_dtype,
        )


if __name__ == "__main__":
    # Small shapes consistent with Scale(scale, nn.Linear(hidden, hidden)):
    # batch=2, seq=8, hidden=128 (lane-friendly).
    B, S, H = 2, 8, 128
    scale = 0.5

    key = jax.random.PRNGKey(0)
    kx, kw, kb = jax.random.split(key, 3)

    x = jax.random.normal(kx, (B, S, H), dtype=jnp.float32)
    weight = jax.random.normal(kw, (H, H), dtype=jnp.float32) * 0.02   # (out, in)
    bias = jax.random.normal(kb, (H,), dtype=jnp.float32) * 0.02

    module = ScaleLinear(weight, bias, scale)   # weight cast hoisted out of the call
    out = module(x)
    jax.block_until_ready(out)

    # Pure-JAX reference: fn(x) * scale in f32. Kernel uses bf16 inputs with f32
    # accumulation, hence the loosened tolerance (pass compute_dtype=jnp.float32
    # for strict parity).
    ref = (jnp.einsum("bsk,nk->bsn", x, weight) + bias) * scale
    assert out.shape == (B, S, H), out.shape
    assert jnp.allclose(out.astype(jnp.float32), ref, atol=2e-2, rtol=2e-2), (
        "mismatch vs reference"
    )

    print("KERNEL_OK")
</pallas_src>

<mosaic_0001>
module attributes {stable_mosaic.version = 11 : i64} {
  func.func @_scale_linear_kernel(%arg0: i32, %arg1: i32, %arg2: i32, %arg3: memref<16x128xbf16, #tpu.memory_space<vmem>>, %arg4: memref<128x128xbf16, #tpu.memory_space<vmem>>, %arg5: memref<1x128xf32, #tpu.memory_space<vmem>>, %arg6: memref<1x1xf32, #tpu.memory_space<smem>>, %arg7: memref<16x128xf32, #tpu.memory_space<vmem>>, %arg8: memref<16x128xf32, #tpu.memory_space<vmem>>) attributes {dimension_semantics = [#tpu.dimension_semantics<parallel>, #tpu.dimension_semantics<parallel>, #tpu.dimension_semantics<arbitrary>], iteration_bounds = array<i64: 1, 1, 1>, scalar_prefetch = 0 : i64, scratch_operands = 1 : i64, tpu.core_type = #tpu.core_type<tc>, window_params = [{transform_indices = @transform_0, window_bounds = array<i64: 16, 128>}, {transform_indices = @transform_1, window_bounds = array<i64: 128, 128>}, {transform_indices = @transform_2, window_bounds = array<i64: 1, 128>}, {transform_indices = @transform_3, window_bounds = array<i64: 1, 1>}, {transform_indices = @transform_4, window_bounds = array<i64: 16, 128>}]} {
    %c0 = arith.constant 0 : index
    %c0_0 = arith.constant 0 : index
    %0 = vector.load %arg3[%c0, %c0_0] : memref<16x128xbf16, #tpu.memory_space<vmem>>, vector<16x128xbf16>
    %c0_1 = arith.constant 0 : index
    %c0_2 = arith.constant 0 : index
    %1 = vector.load %arg4[%c0_1, %c0_2] : memref<128x128xbf16, #tpu.memory_space<vmem>>, vector<128x128xbf16>
    %cst = arith.constant dense<0.000000e+00> : vector<16x128xf32>
    %2 = tpu.matmul %0, %1, %cst {dimension_numbers = #tpu.dot_dimension_numbers<[1], [0], [0], [1], [0, 0, 1, 1], [], []>} : vector<16x128xbf16>, vector<128x128xbf16>, vector<16x128xf32> -> vector<16x128xf32>
    %c0_i32 = arith.constant 0 : i32
    %3 = arith.cmpi eq, %arg2, %c0_i32 : i32
    %4 = arith.extui %3 : i1 to i32
    %c0_i32_3 = arith.constant 0 : i32
    %5 = arith.cmpi ne, %4, %c0_i32_3 : i32
    scf.if %5 {
      %c0_8 = arith.constant 0 : index
      %c0_9 = arith.constant 0 : index
      %12 = vector.load %arg8[%c0_8, %c0_9] : memref<16x128xf32, #tpu.memory_space<vmem>>, vector<16x128xf32>
      tpu.vector_store %arg8[%c0_8, %c0_9], %2 {strides = array<i32>} : memref<16x128xf32, #tpu.memory_space<vmem>>, vector<16x128xf32>,
    } else {
    }
    %c0_i32_4 = arith.constant 0 : i32
    %6 = arith.cmpi sgt, %arg2, %c0_i32_4 : i32
    %7 = arith.extui %6 : i1 to i32
    %c0_i32_5 = arith.constant 0 : i32
    %8 = arith.cmpi ne, %7, %c0_i32_5 : i32
    scf.if %8 {
      %c0_8 = arith.constant 0 : index
      %c0_9 = arith.constant 0 : index
      %12 = vector.load %arg8[%c0_8, %c0_9] : memref<16x128xf32, #tpu.memory_space<vmem>>, vector<16x128xf32>
      %13 = arith.addf %12, %2 : vector<16x128xf32>
      %c0_10 = arith.constant 0 : index
      %c0_11 = arith.constant 0 : index
      %14 = vector.load %arg8[%c0_10, %c0_11] : memref<16x128xf32, #tpu.memory_space<vmem>>, vector<16x128xf32>
      tpu.vector_store %arg8[%c0_10, %c0_11], %13 {strides = array<i32>} : memref<16x128xf32, #tpu.memory_space<vmem>>, vector<16x128xf32>,
    } else {
    }
    %c0_i32_6 = arith.constant 0 : i32
    %9 = arith.cmpi eq, %arg2, %c0_i32_6 : i32
    %10 = arith.extui %9 : i1 to i32
    %c0_i32_7 = arith.constant 0 : i32
    %11 = arith.cmpi ne, %10, %c0_i32_7 : i32
    scf.if %11 {
      %c0_8 = arith.constant 0 : index
      %c0_9 = arith.constant 0 : index
      %12 = vector.load %arg8[%c0_8, %c0_9] : memref<16x128xf32, #tpu.memory_space<vmem>>, vector<16x128xf32>
      %c0_10 = arith.constant 0 : index
      %c0_11 = arith.constant 0 : index
      %13 = vector.load %arg5[%c0_10, %c0_11] : memref<1x128xf32, #tpu.memory_space<vmem>>, vector<1x128xf32>
      %14 = vector.broadcast %13 : vector<1x128xf32> to vector<16x128xf32>
      %15 = arith.addf %12, %14 : vector<16x128xf32>
      %c0_12 = arith.constant 0 : index
      %c0_13 = arith.constant 0 : index
      %16 = memref.load %arg6[%c0_12, %c0_13] : memref<1x1xf32, #tpu.memory_space<smem>>
      %17 = vector.broadcast %16 : f32 to vector<16x128xf32>
      %18 = arith.mulf %15, %17 : vector<16x128xf32>
      %c0_14 = arith.constant 0 : index
      %c0_15 = arith.constant 0 : index
      %19 = vector.load %arg7[%c0_14, %c0_15] : memref<16x128xf32, #tpu.memory_space<vmem>>, vector<16x128xf32>
      tpu.vector_store %arg7[%c0_14, %c0_15], %18 {strides = array<i32>} : memref<16x128xf32, #tpu.memory_space<vmem>>, vector<16x128xf32>,
    } else {
    }
    return
  }
  func.func @transform_0(%arg0: i32, %arg1: i32, %arg2: i32) -> (i32, i32) {
    %c0_i32 = arith.constant 0 : i32
    return %arg0, %arg2 : i32, i32
  }
  func.func @transform_1(%arg0: i32, %arg1: i32, %arg2: i32) -> (i32, i32) {
    %c0_i32 = arith.constant 0 : i32
    return %arg2, %arg1 : i32, i32
  }
  func.func @transform_2(%arg0: i32, %arg1: i32, %arg2: i32) -> (i32, i32) {
    %c0_i32 = arith.constant 0 : i32
    %c0_i32_0 = arith.constant 0 : i32
    return %c0_i32, %arg1 : i32, i32
  }
  func.func @transform_3(%arg0: i32, %arg1: i32, %arg2: i32) -> (i32, i32) {
    %c0_i32 = arith.constant 0 : i32
    %c0_i32_0 = arith.constant 0 : i32
    %c0_i32_1 = arith.constant 0 : i32
    return %c0_i32, %c0_i32_0 : i32, i32
  }
  func.func @transform_4(%arg0: i32, %arg1: i32, %arg2: i32) -> (i32, i32) {
    %c0_i32 = arith.constant 0 : i32
    return %arg0, %arg1 : i32, i32
  }
}

</mosaic_0001>

<llo_original>
// kernel: tpu_custom_call.1
$region0: #{tpu_custom_call.1}
  #allocation0 [shape = 'u32[]', space=smem, size = 0x4, offset = 0x4, fixed_abs, tag = 'smem constant byte address 0x4 - core index']
  #allocation1 [shape = 'u32[144,128]{1,0:T(1,128)}', space=vmem, size = 0x12000, scoped, tag = 'internal scratch']
  #allocation2 [shape = 'f32[16,128]{1,0:T(8,128)}', space=vmem, size = 0x2000, scoped, tag = 'scratch operand']
  #allocation3 [shape = 'f32[1,1]{1,0:T(1,128)S(6)}', space=smem, size = 0x200, scoped, tag = 'scoped memory for tpu_custom_call.1']
  %s0 = inlined_call_operand.hbm [shape: bf16[16,128], index: 0, kind: input, shape index: {}]
  %s1 = inlined_call_operand.hbm [shape: bf16[128,128], index: 1, kind: input, shape index: {}]
  %s2 = inlined_call_operand.vmem [shape: f32[1,128], index: 2, kind: input, shape index: {}]
  %s3 = inlined_call_operand.<no memory space> [shape: f32[1,1], index: 3, kind: input, shape index: {}]
  %s4 = inlined_call_operand.hbm [shape: f32[16,128], index: 4, kind: output, shape index: {}]
  %s5 = sld [smem:[#allocation0]]
  $region46: #{tpu_custom_call.1} parent=0
    _
  %s7 = ssub.s32 1, %s5
  %s8 = scalar_select 0, %s7, %s5
  %9 = sst [smem:[#allocation3]] %s3
  $region1: #{tpu_custom_call.1} parent=0
    #allocation4 [shape = 'u8[4096]{0}', space=vmem, size = 0x1000, scoped, tag = 'input window, operand 0, single buffered']
    #allocation5 [shape = 's32[1]{0}', space=sflag, size = 0x4, scoped, tag = 'scoped memory for tpu_custom_call.1']
    #allocation6 [shape = 's32[1]{0}', space=sflag, size = 0x4, scoped, tag = 'scoped memory for tpu_custom_call.1']
    #allocation7 [shape = 'u8[32768]{0}', space=vmem, size = 0x8000, scoped, tag = 'input window, operand 1, single buffered']
    #allocation8 [shape = 's32[1]{0}', space=sflag, size = 0x4, scoped, tag = 'scoped memory for tpu_custom_call.1']
    #allocation9 [shape = 'u8[8192]{0}', space=vmem, size = 0x2000, scoped, tag = 'output window, operand 0, single buffered']
    %10 = vsyncpa [#allocation5], 0
    %11 = vsyncpa [#allocation8], 0
    %12 = vsyncpa [#allocation6], 0
    // Predicated region
    $region2: #{tpu_custom_call.1} parent=1 // pred_check
      _
    $region3: #{tpu_custom_call.1} parent=1 // pred_check_branch
      %14 = sbr.rel (0) target = $region5
    $region4: #{tpu_custom_call.1} parent=1 // pred_region
      %s16 = ssub.s32 128, 128
      %17 = vsyncadd [#allocation5], %s16
      %s18 = sshll.u32 [#allocation4], 4
      %s19 = int_to_ptr.vmem [resolvable:$true] %s18
      %24 = dma.hbm_to_vmem [thread:$0]  %s0, 128, %s19, [#allocation5], 64, 64, 4
    $region5: #{tpu_custom_call.1} parent=1 // pred_fallthru
      _
    // Predicated region
    $region6: #{tpu_custom_call.1} parent=1 // pred_check
      _
    $region7: #{tpu_custom_call.1} parent=1 // pred_check_branch
      %26 = sbr.rel (0) target = $region9
    $region8: #{tpu_custom_call.1} parent=1 // pred_region
      %s28 = ssub.s32 1024, 1024
      %29 = vsyncadd [#allocation8], %s28
      %s30 = sshll.u32 [#allocation7], 4
      %s31 = int_to_ptr.vmem [resolvable:$true] %s30
      %36 = dma.hbm_to_vmem [thread:$0]  %s1, 1024, %s31, [#allocation8], 64, 64, 4
    $region9: #{tpu_custom_call.1} parent=1 // pred_fallthru
      _
    // Predicated region
    $region10: #{tpu_custom_call.1} parent=1 // pred_check
      _
    $region11: #{tpu_custom_call.1} parent=1 // pred_check_branch
      %38 = sbr.rel (0) target = $region13
    $region12: #{tpu_custom_call.1} parent=1 // pred_region
      _
    $region13: #{tpu_custom_call.1} parent=1 // pred_fallthru
      _
    // Predicated region
    $region14: #{tpu_custom_call.1} parent=1 // pred_check
      _
    $region15: #{tpu_custom_call.1} parent=1 // pred_check_branch
      %40 = sbr.rel (0) target = $region17
    $region16: #{tpu_custom_call.1} parent=1 // pred_region
      _
    $region17: #{tpu_custom_call.1} parent=1 // pred_fallthru
      _
    // Predicated region
    $region18: #{tpu_custom_call.1} parent=1 // pred_check
      _
    $region19: #{tpu_custom_call.1} parent=1 // pred_check_branch
      %42 = sbr.rel (0) target = $region21
    $region20: #{tpu_custom_call.1} parent=1 // pred_region
      %43 = dma.done [#allocation5], 128
    $region21: #{tpu_custom_call.1} parent=1 // pred_fallthru
      _
    // Predicated region
    $region22: #{tpu_custom_call.1} parent=1 // pred_check
      _
    $region23: #{tpu_custom_call.1} parent=1 // pred_check_branch
      %45 = sbr.rel (0) target = $region25
    $region24: #{tpu_custom_call.1} parent=1 // pred_region
      %46 = dma.done [#allocation8], 1024
    $region25: #{tpu_custom_call.1} parent=1 // pred_fallthru
      _
    %v48 = vld [vmem:[#allocation4] sm:$0xf]
    %v49 = vld [vmem:[#allocation4 + $0x4] sm:$0xf]
    %v50 = vld [vmem:[#allocation7] sm:$0xf]
    %v51 = vld [vmem:[#allocation7 + $0x4] sm:$0xf]
    %v52 = vld [vmem:[#allocation7 + $0x8] sm:$0xf]
    %v53 = vld [vmem:[#allocation7 + $0xc] sm:$0xf]
    %v54 = vld [vmem:[#allocation7 + $0x10] sm:$0xf]
    %v55 = vld [vmem:[#allocation7 + $0x14] sm:$0xf]
    %v56 = vld [vmem:[#allocation7 + $0x18] sm:$0xf]
    %v57 = vld [vmem:[#allocation7 + $0x1c] sm:$0xf]
    %v58 = vld [vmem:[#allocation7 + $0x20] sm:$0xf]
    %v59 = vld [vmem:[#allocation7 + $0x24] sm:$0xf]
    %v60 = vld [vmem:[#allocation7 + $0x28] sm:$0xf]
    %v61 = vld [vmem:[#allocation7 + $0x2c] sm:$0xf]
    %v62 = vld [vmem:[#allocation7 + $0x30] sm:$0xf]
    %v63 = vld [vmem:[#allocation7 + $0x34] sm:$0xf]
    %v64 = vld [vmem:[#allocation7 + $0x38] sm:$0xf]
    %v65 = vld [vmem:[#allocation7 + $0x3c] sm:$0xf]
    %v68 = vunpack.c.l.b16 %v48
    %v69 = vunpack.c.l.b16 %v49
    %v70 = vpack.c.b16 %v69, %v68
    %v88 = vunpack.c.l.b16 %v50
    %v89 = vunpack.c.l.b16 %v51
    %v90 = vunpack.c.l.b16 %v52
    %v91 = vunpack.c.l.b16 %v53
    %v92 = vunpack.c.l.b16 %v54
    %v93 = vunpack.c.l.b16 %v55
    %v94 = vunpack.c.l.b16 %v56
    %v95 = vunpack.c.l.b16 %v57
    %v96 = vunpack.c.l.b16 %v58
    %v97 = vunpack.c.l.b16 %v59
    %v98 = vunpack.c.l.b16 %v60
    %v99 = vunpack.c.l.b16 %v61
    %v100 = vunpack.c.l.b16 %v62
    %v101 = vunpack.c.l.b16 %v63
    %v102 = vunpack.c.l.b16 %v64
    %v103 = vunpack.c.l.b16 %v65
    %v104 = vpack.c.b16 %v89, %v88
    %v105 = vpack.c.b16 %v91, %v90
    %v106 = vpack.c.b16 %v93, %v92
    %v107 = vpack.c.b16 %v95, %v94
    %v108 = vpack.c.b16 %v97, %v96
    %v109 = vpack.c.b16 %v99, %v98
    %v110 = vpack.c.b16 %v101, %v100
    %v111 = vpack.c.b16 %v103, %v102
    %120 = vmatprep.subr.bf16.mxu0 0
    %121 = vmatpush1.bf16.msra.mxu0 %v111
    %122 = vmatprep.subr.bf16.mxu0 0
    %123 = vmatpush1.bf16.msra.mxu0 %v110
    %124 = vmatprep.subr.bf16.mxu0 0
    %125 = vmatpush1.bf16.msra.mxu0 %v109
    %126 = vmatprep.subr.bf16.mxu0 0
    %127 = vmatpush1.bf16.msra.mxu0 %v108
    %128 = vmatprep.subr.bf16.mxu0 0
    %129 = vmatpush1.bf16.msra.mxu0 %v107
    %130 = vmatprep.subr.bf16.mxu0 0
    %131 = vmatpush1.bf16.msra.mxu0 %v106
    %132 = vmatprep.subr.bf16.mxu0 0
    %133 = vmatpush1.bf16.msra.mxu0 %v105
    %134 = vmatprep.subr.bf16.mxu0 0
    %135 = vmatpush1.bf16.msra.mxu0 %v104
    %136 = vmatprep.subr.bf16.mxu0 0
    %137 = vmatpush2.bf16.msra.mxu0 0
    %138 = vmatprep.subr.bf16.mxu0 0
    %139 = vmatpush2.bf16.msra.mxu0 0
    %140 = vmatprep.subr.bf16.mxu0 0
    %141 = vmatpush2.bf16.msra.mxu0 0
    %142 = vmatprep.subr.bf16.mxu0 0
    %143 = vmatpush2.bf16.msra.mxu0 0
    %144 = vmatprep.subr.bf16.mxu0 0
    %145 = vmatpush2.bf16.msra.mxu0 0
    %146 = vmatprep.subr.bf16.mxu0 0
    %147 = vmatpush2.bf16.msra.mxu0 0
    %148 = vmatprep.subr.bf16.mxu0 0
    %149 = vmatpush2.bf16.msra.mxu0 0
    %150 = vmatprep.subr.bf16.mxu0 0
    %151 = vmatpush2.bf16.msra.mxu0 0
    %152 = vmatprep.mubr.bf16.mxu0 0
    %153 = vmatmul.mubr.bf16.gmra.mxu0 %v70
    %v154 = vpop.f32.mrf.mxu0
    %v155 = vadd.f32 0.0, %v154
    %v156 = vpop.f32.mrf.mxu0
    %v157 = vpop.f32.mrf.mxu0
    %v158 = vadd.f32 0.0, %v157
    %v159 = vpop.f32.mrf.mxu0
    %160 = vdwg.mxu0
    %p161 = scmp.eq.s32.totalorder 0, 0
    // Predicated region
    $region26: #{tpu_custom_call.1} parent=1 // pred_check
      %p162 = pneg %p161
    $region27: #{tpu_custom_call.1} parent=1 // pred_check_branch
      %164 = sbr.rel (%p162) target = $region29
    $region28: #{tpu_custom_call.1} parent=1 // pred_region
      %165 = vst [vmem:[#allocation2] sm:$0xff] %v155
      %166 = vst [vmem:[#allocation2 + $0x8] sm:$0xff] %v158
    $region29: #{tpu_custom_call.1} parent=1 // pred_fallthru
      _
    %p167 = scmp.gt.s32.totalorder 0, 0
    // Predicated region
    $region30: #{tpu_custom_call.1} parent=1 // pred_check
      %p168 = pneg %p167
    $region31: #{tpu_custom_call.1} parent=1 // pred_check_branch
      %170 = sbr.rel (%p168) target = $region33
    $region32: #{tpu_custom_call.1} parent=1 // pred_region
      %v171 = vld [vmem:[#allocation2] sm:$0xff]
      %v172 = vld [vmem:[#allocation2 + $0x8] sm:$0xff]
      %v173 = vadd.f32 %v171, %v155
      %v174 = vadd.f32 %v172, %v158
      %175 = vst [vmem:[#allocation2] sm:$0xff] %v173
      %176 = vst [vmem:[#allocation2 + $0x8] sm:$0xff] %v174
    $region33: #{tpu_custom_call.1} parent=1 // pred_fallthru
      _
    // Predicated region
    $region34: #{tpu_custom_call.1} parent=1 // pred_check
      %p177 = pneg %p161
    $region35: #{tpu_custom_call.1} parent=1 // pred_check_branch
      %179 = sbr.rel (%p177) target = $region37
    $region36: #{tpu_custom_call.1} parent=1 // pred_region
      %v180 = vld [vmem:[#allocation2] sm:$0xff]
      %v181 = vld [vmem:[#allocation2 + $0x8] sm:$0xff]
      %v182 = vld [vmem:[%s2] sm:$0x1]
      %v184 = vlaneseq
      %v185 = vshrl.u32 %v184, 7
      %v186 = vsub.s32 0, %v185
      %v187 = vrot.slane %v182, %v186
      %v189 = vadd.f32 %v180, %v187
      %v190 = vadd.f32 %v181, %v187
      %s191 = sld [smem:[#allocation3]]
      %v192 = vstv %s191
      %v193 = vmul.f32 %v189, %v192
      %v194 = vmul.f32 %v190, %v192
      %195 = vst [vmem:[#allocation9] sm:$0xff] %v193
      %196 = vst [vmem:[#allocation9 + $0x8] sm:$0xff] %v194
    $region37: #{tpu_custom_call.1} parent=1 // pred_fallthru
      _
    // Predicated region
    $region38: #{tpu_custom_call.1} parent=1 // pred_check
      _
    $region39: #{tpu_custom_call.1} parent=1 // pred_check_branch
      %198 = sbr.rel (0) target = $region41
    $region40: #{tpu_custom_call.1} parent=1 // pred_region
      %s200 = ssub.s32 256, 256
      %201 = vsyncadd [#allocation6], %s200
      %s202 = sshll.u32 [#allocation9], 4
      %s203 = int_to_ptr.vmem [resolvable:$true] %s202
      %208 = dma.vmem_to_hbm [thread:$0]  %s203, 256, %s4, [#allocation6], 128, 128, 8
    $region41: #{tpu_custom_call.1} parent=1 // pred_fallthru
      _
    // Predicated region
    $region42: #{tpu_custom_call.1} parent=1 // pred_check
      _
    $region43: #{tpu_custom_call.1} parent=1 // pred_check_branch
      %210 = sbr.rel (0) target = $region45
    $region44: #{tpu_custom_call.1} parent=1 // pred_region
      %211 = dma.done [#allocation6], 256
    $region45: #{tpu_custom_call.1} parent=1 // pred_fallthru
      _
    %212 = vsyncpa [#allocation5], 1
    %213 = vsyncpa [#allocation8], 1
    %214 = vsyncpa [#allocation6], 1

</llo_original>
